<compile_context>
chip_gen: v7x
topology: tpu7x:2x2x1
jax: 0.10.0
libtpu: 0.0.40
codegen_flags: <defaults>
</compile_context>

<pallas_src>
import functools

import jax
import jax.numpy as jnp
from jax.experimental import pallas as pl
from jax.experimental.pallas import tpu as pltpu


def _round_up(x: int, m: int) -> int:
    return ((x + m - 1) // m) * m


def my_linear_kernel(x_ref, w_ref, b_ref, o_ref):
    # (TB, K_pad) @ (K_pad, N_pad) on the MXU, f32 accumulation.
    y = jnp.dot(x_ref[...], w_ref[...], preferred_element_type=jnp.float32)
    # bias add + ReLU on the VPU; (1, N_pad) bias broadcasts over rows.
    o_ref[...] = jnp.maximum(y + b_ref[...], 0.0).astype(o_ref.dtype)


@functools.partial(jax.jit, static_argnames=("block_b",))
def my_linear(x, w, b, *, block_b: int = 512):
    """relu(x @ w + b) with w in (in_units, units) layout, b in (units,)."""
    B, K = x.shape
    K_w, N = w.shape
    assert K == K_w and b.shape == (N,)

    # Pad to TPU-friendly shapes (all zero padding => numerically exact after
    # slicing the result back down).
    K_pad = _round_up(K, 8)            # sublane-friendly contraction dim
    N_pad = _round_up(N, 128)          # lane-dense output (unmasked stores)
    TB = min(block_b, _round_up(B, 8))  # batch tile, multiple of 8
    B_pad = _round_up(B, TB)

    x_p = jnp.zeros((B_pad, K_pad), x.dtype).at[:B, :K].set(x)
    w_p = jnp.zeros((K_pad, N_pad), w.dtype).at[:K, :N].set(w)
    b_p = jnp.zeros((1, N_pad), b.dtype).at[0, :N].set(b)

    grid = (B_pad // TB,)

    out_p = pl.pallas_call(
        my_linear_kernel,
        out_shape=jax.ShapeDtypeStruct((B_pad, N_pad), x.dtype),
        grid=grid,
        in_specs=[
            # activations: one (TB, K_pad) tile per grid step
            pl.BlockSpec((TB, K_pad), lambda i: (i, 0)),
            # weights / bias: same block every step -> VMEM-resident
            pl.BlockSpec((K_pad, N_pad), lambda i: (0, 0)),
            pl.BlockSpec((1, N_pad), lambda i: (0, 0)),
        ],
        out_specs=pl.BlockSpec((TB, N_pad), lambda i: (i, 0)),
        compiler_params=pltpu.CompilerParams(
            dimension_semantics=("parallel",),
        ),
    )(x_p, w_p, b_p)

    return out_p[:B, :N]


def reference(x, w, b):
    return jnp.maximum(x @ w + b, 0.0)


if __name__ == "__main__":
    key = jax.random.PRNGKey(0)
    kx, kw, kb, kx2 = jax.random.split(key, 4)

    in_units, units = 20, 32

    # X = torch.rand(2, 20) -> uniform [0, 1), shape (2, 20)
    x = jax.random.uniform(kx, (2, in_units), jnp.float32)
    # nn.Parameter(torch.randn(...)) -> standard normal
    w = jax.random.normal(kw, (in_units, units), jnp.float32)
    b = jax.random.normal(kb, (units,), jnp.float32)

    out = my_linear(x, w, b)
    out = jax.block_until_ready(out)
    assert out.shape == (2, units)
    assert jnp.allclose(out, reference(x, w, b), atol=1e-5, rtol=1e-5)

    # Exercise the batched-grid path (multiple TB=512 tiles, resident weights).
    x_big = jax.random.uniform(kx2, (1024, in_units), jnp.float32)
    out_big = jax.block_until_ready(my_linear(x_big, w, b))
    assert out_big.shape == (1024, units)
    assert jnp.allclose(out_big, reference(x_big, w, b), atol=1e-5, rtol=1e-5)

    print("KERNEL_OK")
</pallas_src>

<mosaic_0001>
module attributes {stable_mosaic.version = 11 : i64} {
  func.func @my_linear_kernel(%arg0: i32, %arg1: memref<8x24xf32, #tpu.memory_space<vmem>>, %arg2: memref<24x128xf32, #tpu.memory_space<vmem>>, %arg3: memref<1x128xf32, #tpu.memory_space<vmem>>, %arg4: memref<8x128xf32, #tpu.memory_space<vmem>>) attributes {dimension_semantics = [#tpu.dimension_semantics<parallel>], iteration_bounds = array<i64: 1>, scalar_prefetch = 0 : i64, scratch_operands = 0 : i64, tpu.core_type = #tpu.core_type<tc>, window_params = [{transform_indices = @transform_0, window_bounds = array<i64: 8, 24>}, {pipeline_mode = #tpu.pipeline_mode<synchronous>, transform_indices = @transform_1, window_bounds = array<i64: 24, 128>}, {pipeline_mode = #tpu.pipeline_mode<synchronous>, transform_indices = @transform_2, window_bounds = array<i64: 1, 128>}, {transform_indices = @transform_3, window_bounds = array<i64: 8, 128>}]} {
    %c0 = arith.constant 0 : index
    %c0_0 = arith.constant 0 : index
    %0 = vector.load %arg1[%c0, %c0_0] : memref<8x24xf32, #tpu.memory_space<vmem>>, vector<8x24xf32>
    %c0_1 = arith.constant 0 : index
    %c0_2 = arith.constant 0 : index
    %1 = vector.load %arg2[%c0_1, %c0_2] : memref<24x128xf32, #tpu.memory_space<vmem>>, vector<24x128xf32>
    %cst = arith.constant dense<0.000000e+00> : vector<8x128xf32>
    %2 = tpu.matmul %0, %1, %cst {dimension_numbers = #tpu.dot_dimension_numbers<[1], [0], [0], [1], [0, 0, 1, 1], [], []>} : vector<8x24xf32>, vector<24x128xf32>, vector<8x128xf32> -> vector<8x128xf32>
    %c0_3 = arith.constant 0 : index
    %c0_4 = arith.constant 0 : index
    %3 = vector.load %arg3[%c0_3, %c0_4] : memref<1x128xf32, #tpu.memory_space<vmem>>, vector<1x128xf32>
    %4 = vector.broadcast %3 : vector<1x128xf32> to vector<8x128xf32>
    %5 = arith.addf %2, %4 : vector<8x128xf32>
    %cst_5 = arith.constant 0.000000e+00 : f32
    %6 = vector.broadcast %cst_5 : f32 to vector<8x128xf32>
    %7 = arith.maximumf %5, %6 : vector<8x128xf32>
    %c0_6 = arith.constant 0 : index
    %c0_7 = arith.constant 0 : index
    %8 = vector.load %arg4[%c0_6, %c0_7] : memref<8x128xf32, #tpu.memory_space<vmem>>, vector<8x128xf32>
    tpu.vector_store %arg4[%c0_6, %c0_7], %7 {strides = array<i32>} : memref<8x128xf32, #tpu.memory_space<vmem>>, vector<8x128xf32>,
    return
  }
  func.func @transform_0(%arg0: i32) -> (i32, i32) {
    %c0_i32 = arith.constant 0 : i32
    %c0_i32_0 = arith.constant 0 : i32
    return %arg0, %c0_i32 : i32, i32
  }
  func.func @transform_1(%arg0: i32) -> (i32, i32) {
    %c0_i32 = arith.constant 0 : i32
    %c0_i32_0 = arith.constant 0 : i32
    %c0_i32_1 = arith.constant 0 : i32
    return %c0_i32, %c0_i32_0 : i32, i32
  }
  func.func @transform_2(%arg0: i32) -> (i32, i32) {
    %c0_i32 = arith.constant 0 : i32
    %c0_i32_0 = arith.constant 0 : i32
    %c0_i32_1 = arith.constant 0 : i32
    return %c0_i32, %c0_i32_0 : i32, i32
  }
  func.func @transform_3(%arg0: i32) -> (i32, i32) {
    %c0_i32 = arith.constant 0 : i32
    %c0_i32_0 = arith.constant 0 : i32
    return %arg0, %c0_i32 : i32, i32
  }
}

</mosaic_0001>

<llo_original>
// kernel: my_linear.1
$region0: #{my_linear.1}
  #allocation0 [shape = 'u32[]', space=smem, size = 0x4, offset = 0x4, fixed_abs, tag = 'smem constant byte address 0x4 - core index']
  #allocation1 [shape = 'u32[144,128]{1,0:T(1,128)}', space=vmem, size = 0x12000, scoped, tag = 'internal scratch']
  %s0 = inlined_call_operand.vmem [shape: f32[8,24], index: 0, kind: input, shape index: {}]
  %s1 = inlined_call_operand.vmem [shape: f32[24,128], index: 1, kind: input, shape index: {}]
  %s2 = inlined_call_operand.vmem [shape: f32[1,128], index: 2, kind: input, shape index: {}]
  %s3 = inlined_call_operand.vmem [shape: f32[8,128], index: 3, kind: output, shape index: {}]
  %s4 = sld [smem:[#allocation0]]
  $region22: #{my_linear.1} parent=0
    _
  %s6 = ssub.s32 1, %s4
  %s7 = scalar_select 0, %s6, %s4
  // Predicated region
  $region2: #{my_linear.1} parent=0 // pred_check
    _
  $region3: #{my_linear.1} parent=0 // pred_check_branch
    %9 = sbr.rel (0) target = $region5
  $region4: #{my_linear.1} parent=0 // pred_region
    _
  $region5: #{my_linear.1} parent=0 // pred_fallthru
    _
  // Predicated region
  $region6: #{my_linear.1} parent=0 // pred_check
    _
  $region7: #{my_linear.1} parent=0 // pred_check_branch
    %11 = sbr.rel (0) target = $region9
  $region8: #{my_linear.1} parent=0 // pred_region
    _
  $region9: #{my_linear.1} parent=0 // pred_fallthru
    _
  // Predicated region
  $region10: #{my_linear.1} parent=0 // pred_check
    _
  $region11: #{my_linear.1} parent=0 // pred_check_branch
    %13 = sbr.rel (0) target = $region13
  $region12: #{my_linear.1} parent=0 // pred_region
    _
  $region13: #{my_linear.1} parent=0 // pred_fallthru
    _
  %v14 = vld [vmem:[%s0] sm:$0xff]
  %v15 = vld [vmem:[%s1] sm:$0xff]
  %v16 = vld [vmem:[%s1 + $0x8] sm:$0xff]
  %v17 = vld [vmem:[%s1 + $0x10] sm:$0xff]
  %v18 = vld [vmem:[%s2] sm:$0x1]
  %v20 = vlaneseq
  %v21 = vshrl.u32 %v20, 7
  %v22 = vsub.s32 0, %v21
  %v23 = vrot.slane %v18, %v22
  %vm25 = vcmask 195584
  %v27 = vsel %vm25, %v14, 0
  %29 = vmatprep.subr.mxu0 0.0
  %30 = vmatpush1.msra.mxu0 %v15
  %31 = vmatprep.subr.mxu0 0.0
  %32 = vmatpush1.msra.mxu0 %v16
  %33 = vmatprep.subr.mxu0 0.0
  %34 = vmatpush1.msra.mxu0 %v17
  %35 = vmatprep.subr.mxu0 0.0
  %36 = vmatpush1.msra.mxu0 0.0
  %37 = vmatprep.subr.mxu0 0.0
  %38 = vmatpush1.msra.mxu0 0.0
  %39 = vmatprep.subr.mxu0 0.0
  %40 = vmatpush1.msra.mxu0 0.0
  %41 = vmatprep.subr.mxu0 0.0
  %42 = vmatpush1.msra.mxu0 0.0
  %43 = vmatprep.subr.mxu0 0.0
  %44 = vmatpush1.msra.mxu0 0.0
  %45 = vmatprep.subr.mxu0 0.0
  %46 = vmatpush1.msra.mxu0 0.0
  %47 = vmatprep.subr.mxu0 0.0
  %48 = vmatpush1.msra.mxu0 0.0
  %49 = vmatprep.subr.mxu0 0.0
  %50 = vmatpush1.msra.mxu0 0.0
  %51 = vmatprep.subr.mxu0 0.0
  %52 = vmatpush1.msra.mxu0 0.0
  %53 = vmatprep.subr.mxu0 0.0
  %54 = vmatpush1.msra.mxu0 0.0
  %55 = vmatprep.subr.mxu0 0.0
  %56 = vmatpush1.msra.mxu0 0.0
  %57 = vmatprep.subr.mxu0 0.0
  %58 = vmatpush1.msra.mxu0 0.0
  %59 = vmatprep.subr.mxu0 0.0
  %60 = vmatpush1.msra.mxu0 0.0
  %61 = vmatprep.subr.mxu0 0.0
  %62 = vmatpush1.msra.mxu0 0.0
  %63 = vmatprep.subr.mxu0 0.0
  %64 = vmatpush1.msra.mxu0 0.0
  %65 = vmatprep.subr.mxu0 0.0
  %66 = vmatpush1.msra.mxu0 0.0
  %67 = vmatprep.subr.mxu0 0.0
  %68 = vmatpush1.msra.mxu0 0.0
  %69 = vmatprep.subr.mxu0 0.0
  %70 = vmatpush1.msra.mxu0 0.0
  %71 = vmatprep.subr.mxu0 0.0
  %72 = vmatpush1.msra.mxu0 0.0
  %73 = vmatprep.subr.mxu0 0.0
  %74 = vmatpush1.msra.mxu0 0.0
  %75 = vmatprep.subr.mxu0 0.0
  %76 = vmatpush1.msra.mxu0 0.0
  %77 = vmatprep.subr.mxu0 0.0
  %78 = vmatpush1.msra.mxu0 0.0
  %79 = vmatprep.subr.mxu0 0.0
  %80 = vmatpush1.msra.mxu0 0.0
  %81 = vmatprep.subr.mxu0 0.0
  %82 = vmatpush1.msra.mxu0 0.0
  %83 = vmatprep.subr.mxu0 0.0
  %84 = vmatpush1.msra.mxu0 0.0
  %85 = vmatprep.subr.mxu0 0.0
  %86 = vmatpush1.msra.mxu0 0.0
  %87 = vmatprep.subr.mxu0 0.0
  %88 = vmatpush1.msra.mxu0 0.0
  %89 = vmatprep.subr.mxu0 0.0
  %90 = vmatpush1.msra.mxu0 0.0
  %91 = vmatprep.subr.mxu0 0.0
  %92 = vmatpush1.msra.mxu0 0.0
  %93 = vmatprep.mubr.f32.mxu0 0.0
  %94 = vmatmul.mubr.f32.gmra.mrb[0].mxu0 %v27
  %v95 = vpop.f32.mrb[0].mxu0
  %v96 = vadd.f32 %v23, %v95
  %v97 = vpop.f32.mrb[0].mxu0
  %98 = vdwg.mxu0
  %v99 = vmax.f32 %v96, 0.0
  %100 = vst [vmem:[%s3] sm:$0xff] %v99
  // Predicated region
  $region14: #{my_linear.1} parent=0 // pred_check
    _
  $region15: #{my_linear.1} parent=0 // pred_check_branch
    %102 = sbr.rel (0) target = $region17
  $region16: #{my_linear.1} parent=0 // pred_region
    _
  $region17: #{my_linear.1} parent=0 // pred_fallthru
    _
  // Predicated region
  $region18: #{my_linear.1} parent=0 // pred_check
    _
  $region19: #{my_linear.1} parent=0 // pred_check_branch
    %104 = sbr.rel (0) target = $region21
  $region20: #{my_linear.1} parent=0 // pred_region
    _
  $region21: #{my_linear.1} parent=0 // pred_fallthru
    _

</llo_original>
